<compile_context>
chip_gen: v7x
topology: tpu7x:2x2x1
jax: 0.10.0
libtpu: 0.0.40
codegen_flags: <defaults>
</compile_context>

<pallas_src>
import functools

import jax
import jax.numpy as jnp
from jax.experimental import pallas as pl
from jax.experimental.pallas import tpu as pltpu


def actor_kernel(x_ref, w1_ref, b1_ref, w2_ref, b2_ref, w3_ref, b3_ref, o_ref):
    # x / weights are bf16 (MXU-native); accumulate in f32; elementwise math stays f32.
    x = x_ref[...]
    h1 = jnp.dot(x, w1_ref[...], preferred_element_type=jnp.float32) + b1_ref[...]
    h1 = jnp.maximum(h1, 0.0)
    h2 = jnp.dot(h1.astype(jnp.bfloat16), w2_ref[...],
                 preferred_element_type=jnp.float32) + b2_ref[...]
    h2 = jnp.maximum(h2, 0.0)
    h3 = jnp.dot(h2.astype(jnp.bfloat16), w3_ref[...],
                 preferred_element_type=jnp.float32) + b3_ref[...]
    o_ref[...] = jnp.tanh(h3).astype(o_ref.dtype)


def _round_up(n, m):
    return ((n + m - 1) // m) * m


def prepare_params(params_f32):
    """Pre-cast weights to bf16 once (halves weight HBM traffic); keep biases f32."""
    w1, b1, w2, b2, w3, b3 = params_f32
    return (w1.astype(jnp.bfloat16), b1.astype(jnp.float32),
            w2.astype(jnp.bfloat16), b2.astype(jnp.float32),
            w3.astype(jnp.bfloat16), b3.astype(jnp.float32))


@functools.partial(jax.jit, static_argnames=("block_batch",))
def actor_forward(x, prepared_params, *, block_batch=128):
    w1, b1, w2, b2, w3, b3 = prepared_params
    batch, state_size = x.shape
    action_size = w3.shape[1]

    # Sublane-aligned batch tile; pad batch up to a multiple of the tile.
    tb = min(block_batch, _round_up(batch, 8))
    padded_batch = _round_up(batch, tb)

    x_in = x.astype(jnp.bfloat16)
    if padded_batch != batch:
        x_in = jnp.pad(x_in, ((0, padded_batch - batch), (0, 0)))

    resident = lambda shape: pl.BlockSpec(shape, lambda i: (0, 0))  # stays in VMEM

    out = pl.pallas_call(
        actor_kernel,
        out_shape=jax.ShapeDtypeStruct((padded_batch, action_size), jnp.float32),
        grid_spec=pltpu.PrefetchScalarGridSpec(
            num_scalar_prefetch=0,
            grid=(padded_batch // tb,),
            in_specs=[
                pl.BlockSpec((tb, state_size), lambda i: (i, 0)),
                resident(w1.shape), resident(b1.shape),
                resident(w2.shape), resident(b2.shape),
                resident(w3.shape), resident(b3.shape),
            ],
            out_specs=pl.BlockSpec((tb, action_size), lambda i: (i, 0)),
        ),
        compiler_params=pltpu.CompilerParams(
            # batch axis is independent -> shard across both TensorCores on v7x
            dimension_semantics=("parallel",),
        ),
    )(x_in, w1, b1, w2, b2, w3, b3)

    return out[:batch]


def init_actor_params(key, state_size, action_size, hidden_size):
    # Mimic PyTorch nn.Linear default init: U(-1/sqrt(fan_in), 1/sqrt(fan_in)).
    def linear(k, fan_in, fan_out):
        kw, kb = jax.random.split(k)
        bound = 1.0 / jnp.sqrt(fan_in)
        w = jax.random.uniform(kw, (fan_in, fan_out), jnp.float32, -bound, bound)
        b = jax.random.uniform(kb, (1, fan_out), jnp.float32, -bound, bound)
        return w, b

    k1, k2, k3 = jax.random.split(key, 3)
    w1, b1 = linear(k1, state_size, hidden_size)
    w2, b2 = linear(k2, hidden_size, hidden_size)
    w3, b3 = linear(k3, hidden_size, action_size)
    return (w1, b1, w2, b2, w3, b3)


def actor_reference_f32(x, params_f32):
    w1, b1, w2, b2, w3, b3 = params_f32
    h = jnp.maximum(x @ w1 + b1, 0.0)
    h = jnp.maximum(h @ w2 + b2, 0.0)
    return jnp.tanh(h @ w3 + b3)


def actor_reference_bf16(x, prepared_params):
    # Same mixed-precision recipe as the kernel (bf16 matmul inputs, f32 accumulate),
    # used for a tight numerical check of the kernel itself.
    w1, b1, w2, b2, w3, b3 = prepared_params
    h = jnp.dot(x.astype(jnp.bfloat16), w1, preferred_element_type=jnp.float32) + b1
    h = jnp.maximum(h, 0.0)
    h = jnp.dot(h.astype(jnp.bfloat16), w2, preferred_element_type=jnp.float32) + b2
    h = jnp.maximum(h, 0.0)
    h = jnp.dot(h.astype(jnp.bfloat16), w3, preferred_element_type=jnp.float32) + b3
    return jnp.tanh(h)


if __name__ == "__main__":
    key = jax.random.PRNGKey(0)
    # Actor dims stay small (as the module implies); batch is enlarged so the call is
    # no longer 100% fixed-overhead bound and the batch grid / pipelining is exercised.
    batch, state_size, action_size, hidden_size = 256, 16, 8, 32

    kx, kp = jax.random.split(key)
    x = jax.random.normal(kx, (batch, state_size), jnp.float32)
    params_f32 = init_actor_params(kp, state_size, action_size, hidden_size)
    params = prepare_params(params_f32)

    out = actor_forward(x, params, block_batch=128)
    out = jax.block_until_ready(out)
    assert out.shape == (batch, action_size)

    # Tight check vs. an XLA reference using the identical mixed-precision recipe.
    ref_bf16 = actor_reference_bf16(x, params)
    assert jnp.allclose(out, ref_bf16, atol=2e-3, rtol=2e-3)

    # Looser semantic check vs. the pure-f32 PyTorch-equivalent forward
    # (tanh output is bounded, bf16 matmul inputs introduce ~1e-2 level error).
    ref_f32 = actor_reference_f32(x, params_f32)
    assert jnp.allclose(out, ref_f32, atol=5e-2, rtol=5e-2)

    print("KERNEL_OK")
</pallas_src>

<mosaic_0001>
module attributes {stable_mosaic.version = 11 : i64} {
  func.func @actor_kernel(%arg0: i32, %arg1: memref<128x16xbf16, #tpu.memory_space<vmem>>, %arg2: memref<16x32xbf16, #tpu.memory_space<vmem>>, %arg3: memref<1x32xf32, #tpu.memory_space<vmem>>, %arg4: memref<32x32xbf16, #tpu.memory_space<vmem>>, %arg5: memref<1x32xf32, #tpu.memory_space<vmem>>, %arg6: memref<32x8xbf16, #tpu.memory_space<vmem>>, %arg7: memref<1x8xf32, #tpu.memory_space<vmem>>, %arg8: memref<128x8xf32, #tpu.memory_space<vmem>>) attributes {dimension_semantics = [#tpu.dimension_semantics<parallel>], iteration_bounds = array<i64: 2>, scalar_prefetch = 0 : i64, scratch_operands = 0 : i64, tpu.core_type = #tpu.core_type<tc>, window_params = [{transform_indices = @transform_0, window_bounds = array<i64: 128, 16>}, {pipeline_mode = #tpu.pipeline_mode<synchronous>, transform_indices = @transform_1, window_bounds = array<i64: 16, 32>}, {pipeline_mode = #tpu.pipeline_mode<synchronous>, transform_indices = @transform_2, window_bounds = array<i64: 1, 32>}, {pipeline_mode = #tpu.pipeline_mode<synchronous>, transform_indices = @transform_3, window_bounds = array<i64: 32, 32>}, {pipeline_mode = #tpu.pipeline_mode<synchronous>, transform_indices = @transform_4, window_bounds = array<i64: 1, 32>}, {pipeline_mode = #tpu.pipeline_mode<synchronous>, transform_indices = @transform_5, window_bounds = array<i64: 32, 8>}, {pipeline_mode = #tpu.pipeline_mode<synchronous>, transform_indices = @transform_6, window_bounds = array<i64: 1, 8>}, {transform_indices = @transform_7, window_bounds = array<i64: 128, 8>}]} {
    %c0 = arith.constant 0 : index
    %c0_0 = arith.constant 0 : index
    %0 = vector.load %arg1[%c0, %c0_0] : memref<128x16xbf16, #tpu.memory_space<vmem>>, vector<128x16xbf16>
    %c0_1 = arith.constant 0 : index
    %c0_2 = arith.constant 0 : index
    %1 = vector.load %arg2[%c0_1, %c0_2] : memref<16x32xbf16, #tpu.memory_space<vmem>>, vector<16x32xbf16>
    %cst = arith.constant dense<0.000000e+00> : vector<128x32xf32>
    %2 = tpu.matmul %0, %1, %cst {dimension_numbers = #tpu.dot_dimension_numbers<[1], [0], [0], [1], [0, 0, 1, 1], [], []>} : vector<128x16xbf16>, vector<16x32xbf16>, vector<128x32xf32> -> vector<128x32xf32>
    %c0_3 = arith.constant 0 : index
    %c0_4 = arith.constant 0 : index
    %3 = vector.load %arg3[%c0_3, %c0_4] : memref<1x32xf32, #tpu.memory_space<vmem>>, vector<1x32xf32>
    %4 = vector.broadcast %3 : vector<1x32xf32> to vector<128x32xf32>
    %5 = arith.addf %2, %4 : vector<128x32xf32>
    %cst_5 = arith.constant 0.000000e+00 : f32
    %6 = vector.broadcast %cst_5 : f32 to vector<128x32xf32>
    %7 = arith.maximumf %5, %6 : vector<128x32xf32>
    %8 = arith.truncf %7 : vector<128x32xf32> to vector<128x32xbf16>
    %c0_6 = arith.constant 0 : index
    %c0_7 = arith.constant 0 : index
    %9 = vector.load %arg4[%c0_6, %c0_7] : memref<32x32xbf16, #tpu.memory_space<vmem>>, vector<32x32xbf16>
    %cst_8 = arith.constant dense<0.000000e+00> : vector<128x32xf32>
    %10 = tpu.matmul %8, %9, %cst_8 {dimension_numbers = #tpu.dot_dimension_numbers<[1], [0], [0], [1], [0, 0, 1, 1], [], []>} : vector<128x32xbf16>, vector<32x32xbf16>, vector<128x32xf32> -> vector<128x32xf32>
    %c0_9 = arith.constant 0 : index
    %c0_10 = arith.constant 0 : index
    %11 = vector.load %arg5[%c0_9, %c0_10] : memref<1x32xf32, #tpu.memory_space<vmem>>, vector<1x32xf32>
    %12 = vector.broadcast %11 : vector<1x32xf32> to vector<128x32xf32>
    %13 = arith.addf %10, %12 : vector<128x32xf32>
    %cst_11 = arith.constant 0.000000e+00 : f32
    %14 = vector.broadcast %cst_11 : f32 to vector<128x32xf32>
    %15 = arith.maximumf %13, %14 : vector<128x32xf32>
    %16 = arith.truncf %15 : vector<128x32xf32> to vector<128x32xbf16>
    %c0_12 = arith.constant 0 : index
    %c0_13 = arith.constant 0 : index
    %17 = vector.load %arg6[%c0_12, %c0_13] : memref<32x8xbf16, #tpu.memory_space<vmem>>, vector<32x8xbf16>
    %cst_14 = arith.constant dense<0.000000e+00> : vector<128x8xf32>
    %18 = tpu.matmul %16, %17, %cst_14 {dimension_numbers = #tpu.dot_dimension_numbers<[1], [0], [0], [1], [0, 0, 1, 1], [], []>} : vector<128x32xbf16>, vector<32x8xbf16>, vector<128x8xf32> -> vector<128x8xf32>
    %c0_15 = arith.constant 0 : index
    %c0_16 = arith.constant 0 : index
    %19 = vector.load %arg7[%c0_15, %c0_16] : memref<1x8xf32, #tpu.memory_space<vmem>>, vector<1x8xf32>
    %20 = vector.broadcast %19 : vector<1x8xf32> to vector<128x8xf32>
    %21 = arith.addf %18, %20 : vector<128x8xf32>
    %22 = math.tanh %21 : vector<128x8xf32>
    %c0_17 = arith.constant 0 : index
    %c0_18 = arith.constant 0 : index
    %23 = vector.load %arg8[%c0_17, %c0_18] : memref<128x8xf32, #tpu.memory_space<vmem>>, vector<128x8xf32>
    tpu.vector_store %arg8[%c0_17, %c0_18], %22 {strides = array<i32>} : memref<128x8xf32, #tpu.memory_space<vmem>>, vector<128x8xf32>,
    return
  }
  func.func @transform_0(%arg0: i32) -> (i32, i32) {
    %c0_i32 = arith.constant 0 : i32
    %c0_i32_0 = arith.constant 0 : i32
    return %arg0, %c0_i32 : i32, i32
  }
  func.func @transform_1(%arg0: i32) -> (i32, i32) {
    %c0_i32 = arith.constant 0 : i32
    %c0_i32_0 = arith.constant 0 : i32
    %c0_i32_1 = arith.constant 0 : i32
    return %c0_i32, %c0_i32_0 : i32, i32
  }
  func.func @transform_2(%arg0: i32) -> (i32, i32) {
    %c0_i32 = arith.constant 0 : i32
    %c0_i32_0 = arith.constant 0 : i32
    %c0_i32_1 = arith.constant 0 : i32
    return %c0_i32, %c0_i32_0 : i32, i32
  }
  func.func @transform_3(%arg0: i32) -> (i32, i32) {
    %c0_i32 = arith.constant 0 : i32
    %c0_i32_0 = arith.constant 0 : i32
    %c0_i32_1 = arith.constant 0 : i32
    return %c0_i32, %c0_i32_0 : i32, i32
  }
  func.func @transform_4(%arg0: i32) -> (i32, i32) {
    %c0_i32 = arith.constant 0 : i32
    %c0_i32_0 = arith.constant 0 : i32
    %c0_i32_1 = arith.constant 0 : i32
    return %c0_i32, %c0_i32_0 : i32, i32
  }
  func.func @transform_5(%arg0: i32) -> (i32, i32) {
    %c0_i32 = arith.constant 0 : i32
    %c0_i32_0 = arith.constant 0 : i32
    %c0_i32_1 = arith.constant 0 : i32
    return %c0_i32, %c0_i32_0 : i32, i32
  }
  func.func @transform_6(%arg0: i32) -> (i32, i32) {
    %c0_i32 = arith.constant 0 : i32
    %c0_i32_0 = arith.constant 0 : i32
    %c0_i32_1 = arith.constant 0 : i32
    return %c0_i32, %c0_i32_0 : i32, i32
  }
  func.func @transform_7(%arg0: i32) -> (i32, i32) {
    %c0_i32 = arith.constant 0 : i32
    %c0_i32_0 = arith.constant 0 : i32
    return %arg0, %c0_i32 : i32, i32
  }
}

</mosaic_0001>

<llo_original>
// kernel: actor_forward.1
$region0: #{actor_forward.1}
  #allocation0 [shape = 'u32[]', space=smem, size = 0x4, offset = 0x4, fixed_abs, tag = 'smem constant byte address 0x4 - core index']
  #allocation1 [shape = 'u32[144,128]{1,0:T(1,128)}', space=vmem, size = 0x12000, scoped, tag = 'internal scratch']
  %s0 = inlined_call_operand.vmem [shape: bf16[256,16], index: 0, kind: input, shape index: {}]
  %s1 = inlined_call_operand.vmem [shape: bf16[16,32], index: 1, kind: input, shape index: {}]
  %s2 = inlined_call_operand.vmem [shape: f32[1,32], index: 2, kind: input, shape index: {}]
  %s3 = inlined_call_operand.vmem [shape: bf16[32,32], index: 3, kind: input, shape index: {}]
  %s4 = inlined_call_operand.vmem [shape: f32[1,32], index: 4, kind: input, shape index: {}]
  %s5 = inlined_call_operand.vmem [shape: bf16[32,8], index: 5, kind: input, shape index: {}]
  %s6 = inlined_call_operand.vmem [shape: f32[1,8], index: 6, kind: input, shape index: {}]
  %s7 = inlined_call_operand.vmem [shape: f32[256,8], index: 7, kind: output, shape index: {}]
  %s8 = sld [smem:[#allocation0]]
  $region61: #{actor_forward.1} parent=0
    _
  %s10 = ssub.s32 1, %s8
  %s11 = scalar_select 0, %s10, %s8
  loop: start=0, step=1, limit=4
  $region2: #{actor_forward.1} parent=0 // loop_pre_header
    _
  $region3: #{actor_forward.1} parent=0 // loop_header
    %s13 = sphi 0, %s17
    %p14 = scmp.ge.s32.totalorder %s13, 4
    %s23 = sphi 0, %s25
    %s26 = sphi 0, %s23
    %s27 = sphi 0, %s26
    %s43 = sphi 0, %s27
    %s47 = sphi 0, %s47
    %s49 = sphi 0, %s47
    %s50 = sphi 0, %s49
    %s64 = sphi 0, %s50
    %s68 = sphi 0, %s68
    %s70 = sphi 0, %s68
    %s71 = sphi 0, %s70
    %s85 = sphi 0, %s71
    %s89 = sphi 0, %s89
    %s91 = sphi 0, %s89
    %s92 = sphi 0, %s91
    %s106 = sphi 0, %s92
    %s110 = sphi 0, %s110
    %s112 = sphi 0, %s110
    %s113 = sphi 0, %s112
    %s127 = sphi 0, %s113
    %s131 = sphi 0, %s131
    %s133 = sphi 0, %s131
    %s134 = sphi 0, %s133
    %s148 = sphi 0, %s134
    %s152 = sphi 0, %s152
    %s154 = sphi 0, %s152
    %s155 = sphi 0, %s154
    %s169 = sphi 0, %s155
    %s175 = sphi 0, %s177
    %s178 = sphi 0, %s175
    %s179 = sphi 0, %s178
    %s195 = sphi 0, %s179
  $region4: #{actor_forward.1} parent=0 // loop_header_branch
    %16 = sbr.rel (%p14) target = $region8
  $region5: #{actor_forward.1} parent=0 // loop_body
    %s18 = ssub.s32 %s13, 1
    %s19 = ssub.s32 %s13, 2
    %s20 = sadd.s32 %s13, 1
    %s21 = ssub.s32 %s13, %s20
    %p22 = scmp.eq.s32.totalorder %s21, 0
    %s24 = sadd.s32 %s23, 1
    %s25 = scalar_select %p22, %s23, %s24
    %p28 = pneg %p22
    %p29 = scmp.eq.s32.totalorder %s13, 1
    %p30 = por %p28, %p29
    %p31 = scmp.ne.s32.totalorder %s23, %s26
    %p32 = scmp.eq.s32.totalorder %s13, 0
    %p33 = por %p31, %p32
    %p34 = scmp.ne.s32.totalorder %s23, %s26
    %p35 = scmp.eq.s32.totalorder %s18, 1
    %p36 = por %p34, %p35
    %p37 = scmp.ne.s32.totalorder %s26, %s27
    %p38 = scmp.eq.s32.totalorder %s18, 0
    %p39 = por %p37, %p38
    %p40 = scmp.ne.s32.totalorder %s26, %s27
    %p41 = scmp.eq.s32.totalorder %s19, 1
    %p42 = por %p40, %p41
    %p44 = scmp.ne.s32.totalorder %s27, %s43
    %p45 = scmp.eq.s32.totalorder %s19, 0
    %p46 = por %p44, %p45
    %s48 = sadd.s32 %s47, 1
    %p51 = scmp.eq.s32.totalorder %s13, 1
    %p52 = scmp.ne.s32.totalorder %s47, %s49
    %p53 = scmp.eq.s32.totalorder %s13, 0
    %p54 = por %p52, %p53
    %p55 = scmp.ne.s32.totalorder %s47, %s49
    %p56 = scmp.eq.s32.totalorder %s18, 1
    %p57 = por %p55, %p56
    %p58 = scmp.ne.s32.totalorder %s49, %s50
    %p59 = scmp.eq.s32.totalorder %s18, 0
    %p60 = por %p58, %p59
    %p61 = scmp.ne.s32.totalorder %s49, %s50
    %p62 = scmp.eq.s32.totalorder %s19, 1
    %p63 = por %p61, %p62
    %p65 = scmp.ne.s32.totalorder %s50, %s64
    %p66 = scmp.eq.s32.totalorder %s19, 0
    %p67 = por %p65, %p66
    %s69 = sadd.s32 %s68, 1
    %p72 = scmp.eq.s32.totalorder %s13, 1
    %p73 = scmp.ne.s32.totalorder %s68, %s70
    %p74 = scmp.eq.s32.totalorder %s13, 0
    %p75 = por %p73, %p74
    %p76 = scmp.ne.s32.totalorder %s68, %s70
    %p77 = scmp.eq.s32.totalorder %s18, 1
    %p78 = por %p76, %p77
    %p79 = scmp.ne.s32.totalorder %s70, %s71
    %p80 = scmp.eq.s32.totalorder %s18, 0
    %p81 = por %p79, %p80
    %p82 = scmp.ne.s32.totalorder %s70, %s71
    %p83 = scmp.eq.s32.totalorder %s19, 1
    %p84 = por %p82, %p83
    %p86 = scmp.ne.s32.totalorder %s71, %s85
    %p87 = scmp.eq.s32.totalorder %s19, 0
    %p88 = por %p86, %p87
    %s90 = sadd.s32 %s89, 1
    %p93 = scmp.eq.s32.totalorder %s13, 1
    %p94 = scmp.ne.s32.totalorder %s89, %s91
    %p95 = scmp.eq.s32.totalorder %s13, 0
    %p96 = por %p94, %p95
    %p97 = scmp.ne.s32.totalorder %s89, %s91
    %p98 = scmp.eq.s32.totalorder %s18, 1
    %p99 = por %p97, %p98
    %p100 = scmp.ne.s32.totalorder %s91, %s92
    %p101 = scmp.eq.s32.totalorder %s18, 0
    %p102 = por %p100, %p101
    %p103 = scmp.ne.s32.totalorder %s91, %s92
    %p104 = scmp.eq.s32.totalorder %s19, 1
    %p105 = por %p103, %p104
    %p107 = scmp.ne.s32.totalorder %s92, %s106
    %p108 = scmp.eq.s32.totalorder %s19, 0
    %p109 = por %p107, %p108
    %s111 = sadd.s32 %s110, 1
    %p114 = scmp.eq.s32.totalorder %s13, 1
    %p115 = scmp.ne.s32.totalorder %s110, %s112
    %p116 = scmp.eq.s32.totalorder %s13, 0
    %p117 = por %p115, %p116
    %p118 = scmp.ne.s32.totalorder %s110, %s112
    %p119 = scmp.eq.s32.totalorder %s18, 1
    %p120 = por %p118, %p119
    %p121 = scmp.ne.s32.totalorder %s112, %s113
    %p122 = scmp.eq.s32.totalorder %s18, 0
    %p123 = por %p121, %p122
    %p124 = scmp.ne.s32.totalorder %s112, %s113
    %p125 = scmp.eq.s32.totalorder %s19, 1
    %p126 = por %p124, %p125
    %p128 = scmp.ne.s32.totalorder %s113, %s127
    %p129 = scmp.eq.s32.totalorder %s19, 0
    %p130 = por %p128, %p129
    %s132 = sadd.s32 %s131, 1
    %p135 = scmp.eq.s32.totalorder %s13, 1
    %p136 = scmp.ne.s32.totalorder %s131, %s133
    %p137 = scmp.eq.s32.totalorder %s13, 0
    %p138 = por %p136, %p137
    %p139 = scmp.ne.s32.totalorder %s131, %s133
    %p140 = scmp.eq.s32.totalorder %s18, 1
    %p141 = por %p139, %p140
    %p142 = scmp.ne.s32.totalorder %s133, %s134
    %p143 = scmp.eq.s32.totalorder %s18, 0
    %p144 = por %p142, %p143
    %p145 = scmp.ne.s32.totalorder %s133, %s134
    %p146 = scmp.eq.s32.totalorder %s19, 1
    %p147 = por %p145, %p146
    %p149 = scmp.ne.s32.totalorder %s134, %s148
    %p150 = scmp.eq.s32.totalorder %s19, 0
    %p151 = por %p149, %p150
    %s153 = sadd.s32 %s152, 1
    %p156 = scmp.eq.s32.totalorder %s13, 1
    %p157 = scmp.ne.s32.totalorder %s152, %s154
    %p158 = scmp.eq.s32.totalorder %s13, 0
    %p159 = por %p157, %p158
    %p160 = scmp.ne.s32.totalorder %s152, %s154
    %p161 = scmp.eq.s32.totalorder %s18, 1
    %p162 = por %p160, %p161
    %p163 = scmp.ne.s32.totalorder %s154, %s155
    %p164 = scmp.eq.s32.totalorder %s18, 0
    %p165 = por %p163, %p164
    %p166 = scmp.ne.s32.totalorder %s154, %s155
    %p167 = scmp.eq.s32.totalorder %s19, 1
    %p168 = por %p166, %p167
    %p170 = scmp.ne.s32.totalorder %s155, %s169
    %p171 = scmp.eq.s32.totalorder %s19, 0
    %p172 = por %p170, %p171
    %s173 = ssub.s32 %s13, %s20
    %p174 = scmp.eq.s32.totalorder %s173, 0
    %s176 = sadd.s32 %s175, 1
    %s177 = scalar_select %p174, %s175, %s176
    %p180 = pneg %p174
    %p181 = scmp.eq.s32.totalorder %s13, 1
    %p182 = por %p180, %p181
    %p183 = scmp.ne.s32.totalorder %s175, %s178
    %p184 = scmp.eq.s32.totalorder %s13, 0
    %p185 = por %p183, %p184
    %p186 = scmp.ne.s32.totalorder %s175, %s178
    %p187 = scmp.eq.s32.totalorder %s18, 1
    %p188 = por %p186, %p187
    %p189 = scmp.ne.s32.totalorder %s178, %s179
    %p190 = scmp.eq.s32.totalorder %s18, 0
    %p191 = por %p189, %p190
    %p192 = scmp.ne.s32.totalorder %s178, %s179
    %p193 = scmp.eq.s32.totalorder %s19, 1
    %p194 = por %p192, %p193
    %p196 = scmp.ne.s32.totalorder %s179, %s195
    %p197 = scmp.eq.s32.totalorder %s19, 0
    %p198 = por %p196, %p197
    %p199 = scmp.le.s32.totalorder 1, %s13
    %p200 = scmp.lt.s32.totalorder %s13, 3
    %p201 = pnand %p199, %p200
    %p202 = pneg %p201
    // Predicated region
    $region9: #{actor_forward.1} parent=5 // pred_check
      _
    $region10: #{actor_forward.1} parent=5 // pred_check_branch
      %204 = sbr.rel (%p201) target = $region12
    $region11: #{actor_forward.1} parent=5 // pred_region
      %s205 = ssub.s32 %s13, 1
      // Predicated region
      $region13: #{actor_forward.1} parent=11 // pred_check
        %p206 = pneg %p60
      $region14: #{actor_forward.1} parent=11 // pred_check_branch
        %208 = sbr.rel (%p206) target = $region16
      $region15: #{actor_forward.1} parent=11 // pred_region
        _
      $region16: #{actor_forward.1} parent=11 // pred_fallthru
        _
      // Predicated region
      $region17: #{actor_forward.1} parent=11 // pred_check
        %p209 = pneg %p81
      $region18: #{actor_forward.1} parent=11 // pred_check_branch
        %211 = sbr.rel (%p209) target = $region20
      $region19: #{actor_forward.1} parent=11 // pred_region
        _
      $region20: #{actor_forward.1} parent=11 // pred_fallthru
        _
      // Predicated region
      $region21: #{actor_forward.1} parent=11 // pred_check
        %p212 = pneg %p102
      $region22: #{actor_forward.1} parent=11 // pred_check_branch
        %214 = sbr.rel (%p212) target = $region24
      $region23: #{actor_forward.1} parent=11 // pred_region
        _
      $region24: #{actor_forward.1} parent=11 // pred_fallthru
        _
      // Predicated region
      $region25: #{actor_forward.1} parent=11 // pred_check
        %p215 = pneg %p123
      $region26: #{actor_forward.1} parent=11 // pred_check_branch
        %217 = sbr.rel (%p215) target = $region28
      $region27: #{actor_forward.1} parent=11 // pred_region
        _
      $region28: #{actor_forward.1} parent=11 // pred_fallthru
        _
      // Predicated region
      $region29: #{actor_forward.1} parent=11 // pred_check
        %p218 = pneg %p144
      $region30: #{actor_forward.1} parent=11 // pred_check_branch
        %220 = sbr.rel (%p218) target = $region32
      $region31: #{actor_forward.1} parent=11 // pred_region
        _
      $region32: #{actor_forward.1} parent=11 // pred_fallthru
        _
      // Predicated region
      $region33: #{actor_forward.1} parent=11 // pred_check
        %p221 = pneg %p165
      $region34: #{actor_forward.1} parent=11 // pred_check_branch
        %223 = sbr.rel (%p221) target = $region36
      $region35: #{actor_forward.1} parent=11 // pred_region
        _
      $region36: #{actor_forward.1} parent=11 // pred_fallthru
        _
    $region12: #{actor_forward.1} parent=5 // pred_fallthru
      _
    %p224 = scmp.lt.s32.totalorder %s13, 2
    // Predicated region
    $region37: #{actor_forward.1} parent=5 // pred_check
      %p225 = pneg %p224
    $region38: #{actor_forward.1} parent=5 // pred_check_branch
      %227 = sbr.rel (%p225) target = $region40
    $region39: #{actor_forward.1} parent=5 // pred_region
      // Predicated region
      $region41: #{actor_forward.1} parent=39 // pred_check
        %p228 = pneg %p33
      $region42: #{actor_forward.1} parent=39 // pred_check_branch
        %230 = sbr.rel (%p228) target = $region44
      $region43: #{actor_forward.1} parent=39 // pred_region
        %s231 = smul.u32 16, %s13
        %p232 = scmp.lt.s32.totalorder %s231, 31
        %s233 = scalar_select %p232, %s231, 31
        %s234 = smul.addr %s233, 4
        %s235 = scalar_lea.vmem %s0, %s234
        %s236 = smul.u32 16, %s13
      $region44: #{actor_forward.1} parent=39 // pred_fallthru
        _
    $region40: #{actor_forward.1} parent=5 // pred_fallthru
      _
    %p237 = scmp.le.s32.totalorder 1, %s13
    %p238 = scmp.lt.s32.totalorder %s13, 3
    %p239 = pnand %p237, %p238
    %p240 = pneg %p239
    // Predicated region
    $region45: #{actor_forward.1} parent=5 // pred_check
      _
    $region46: #{actor_forward.1} parent=5 // pred_check_branch
      %242 = sbr.rel (%p239) target = $region48
    $region47: #{actor_forward.1} parent=5 // pred_region
      %s243 = ssub.s32 %s13, 1
      %s244 = smul.u32 16, %s18
      %p245 = scmp.lt.s32.totalorder %s244, 31
      %s246 = scalar_select %p245, %s244, 31
      %s247 = smul.addr %s246, 4
      %s248 = scalar_lea.vmem %s0, %s247
      %p249 = pneg %p39
      %p250 = pneg %p36
      %p251 = pneg %p60
      %p252 = pneg %p57
      %p253 = pneg %p81
      %p254 = pneg %p78
      %p255 = pneg %p102
      %p256 = pneg %p99
      %p257 = pneg %p123
      %p258 = pneg %p120
      %p259 = pneg %p144
      %p260 = pneg %p141
      %p261 = pneg %p165
      %p262 = pneg %p162
      %p263 = pneg %p191
      %p264 = pneg %p188
      %s265 = smul.u32 16, %s18
      %p266 = scmp.lt.s32.totalorder %s265, 31
      %s267 = scalar_select %p266, %s265, 31
      %s268 = smul.addr %s267, 8
      %s269 = scalar_lea.vmem %s7, %s268
      %s270 = smul.u32 16, %s18
      %p271 = scmp.lt.s32.totalorder %s270, 31
      %s272 = scalar_select %p271, %s270, 31
      %s273 = smul.addr %s272, 4
      %s274 = scalar_lea.vmem %s0, %s273
      %s275 = smul.u32 16, %s18
      %s276 = smul.u32 16, %s18
      %p277 = scmp.lt.s32.totalorder %s276, 31
      %s278 = scalar_select %p277, %s276, 31
      %s279 = smul.addr %s278, 8
      %s280 = scalar_lea.vmem %s7, %s279
      %s281 = smul.u32 16, %s18
      %v283 = vld [vmem:[%s274] sm:$0xf]
      %v284 = vld [vmem:[%s274 + $0x4] sm:$0xf]
      %v285 = vld [vmem:[%s274 + $0x8] sm:$0xf]
      %v286 = vld [vmem:[%s274 + $0xc] sm:$0xf]
      %v287 = vld [vmem:[%s274 + $0x10] sm:$0xf]
      %v288 = vld [vmem:[%s274 + $0x14] sm:$0xf]
      %v289 = vld [vmem:[%s274 + $0x18] sm:$0xf]
      %v290 = vld [vmem:[%s274 + $0x1c] sm:$0xf]
      %v291 = vld [vmem:[%s274 + $0x20] sm:$0xf]
      %v292 = vld [vmem:[%s274 + $0x24] sm:$0xf]
      %v293 = vld [vmem:[%s274 + $0x28] sm:$0xf]
      %v294 = vld [vmem:[%s274 + $0x2c] sm:$0xf]
      %v295 = vld [vmem:[%s274 + $0x30] sm:$0xf]
      %v296 = vld [vmem:[%s274 + $0x34] sm:$0xf]
      %v297 = vld [vmem:[%s274 + $0x38] sm:$0xf]
      %v298 = vld [vmem:[%s274 + $0x3c] sm:$0xf]
      %v299 = vld [vmem:[%s1] sm:$0xf]
      %v300 = vld [vmem:[%s1 + $0x4] sm:$0xf]
      %v301 = vld [vmem:[%s2] sm:$0x1]
      %v303 = vlaneseq
      %v304 = vshrl.u32 %v303, 7
      %v305 = vsub.s32 0, %v304
      %v306 = vrot.slane %v301, %v305
      %v324 = vunpack.c.l.b16 %v283
      %v325 = vunpack.c.l.b16 %v284
      %v326 = vunpack.c.l.b16 %v285
      %v327 = vunpack.c.l.b16 %v286
      %v328 = vunpack.c.l.b16 %v287
      %v329 = vunpack.c.l.b16 %v288
      %v330 = vunpack.c.l.b16 %v289
      %v331 = vunpack.c.l.b16 %v290
      %v332 = vunpack.c.l.b16 %v291
      %v333 = vunpack.c.l.b16 %v292
      %v334 = vunpack.c.l.b16 %v293
      %v335 = vunpack.c.l.b16 %v294
      %v336 = vunpack.c.l.b16 %v295
      %v337 = vunpack.c.l.b16 %v296
      %v338 = vunpack.c.l.b16 %v297
      %v339 = vunpack.c.l.b16 %v298
      %v340 = vpack.c.b16 %v325, %v324
      %v341 = vpack.c.b16 %v327, %v326
      %v342 = vpack.c.b16 %v329, %v328
      %v343 = vpack.c.b16 %v331, %v330
      %v344 = vpack.c.b16 %v333, %v332
      %v345 = vpack.c.b16 %v335, %v334
      %v346 = vpack.c.b16 %v337, %v336
      %v347 = vpack.c.b16 %v339, %v338
      %v350 = vunpack.c.l.b16 %v299
      %v351 = vunpack.c.l.b16 %v300
      %v352 = vpack.c.b16 %v351, %v350
      %vm354 = vcmask 130048
      %v356 = vsel %vm354, %v340, 0
      %v359 = vsel %vm354, %v341, 0
      %v362 = vsel %vm354, %v342, 0
      %v365 = vsel %vm354, %v343, 0
      %v368 = vsel %vm354, %v344, 0
      %v371 = vsel %vm354, %v345, 0
      %v374 = vsel %vm354, %v346, 0
      %v377 = vsel %vm354, %v347, 0
      %379 = vmatprep.subr.bf16.mxu0 0
      %380 = vmatpush1.bf16.msra.mxu0 %v352
      %381 = vmatprep.subr.bf16.mxu0 0
      %382 = vmatpush1.bf16.msra.mxu0 0
      %383 = vmatprep.subr.bf16.mxu0 0
      %384 = vmatpush1.bf16.msra.mxu0 0
      %385 = vmatprep.subr.bf16.mxu0 0
      %386 = vmatpush1.bf16.msra.mxu0 0
      %387 = vmatprep.subr.bf16.mxu0 0
      %388 = vmatpush1.bf16.msra.mxu0 0
      %389 = vmatprep.subr.bf16.mxu0 0
      %390 = vmatpush1.bf16.msra.mxu0 0
      %391 = vmatprep.subr.bf16.mxu0 0
      %392 = vmatpush1.bf16.msra.mxu0 0
      %393 = vmatprep.subr.bf16.mxu0 0
      %394 = vmatpush1.bf16.msra.mxu0 0
      %395 = vmatprep.subr.bf16.mxu0 0
      %396 = vmatpush1.bf16.msra.mxu0 0
      %397 = vmatprep.subr.bf16.mxu0 0
      %398 = vmatpush1.bf16.msra.mxu0 0
      %399 = vmatprep.subr.bf16.mxu0 0
      %400 = vmatpush1.bf16.msra.mxu0 0
      %401 = vmatprep.subr.bf16.mxu0 0
      %402 = vmatpush1.bf16.msra.mxu0 0
      %403 = vmatprep.subr.bf16.mxu0 0
      %404 = vmatpush1.bf16.msra.mxu0 0
      %405 = vmatprep.subr.bf16.mxu0 0
      %406 = vmatpush1.bf16.msra.mxu0 0
      %407 = vmatprep.subr.bf16.mxu0 0
      %408 = vmatpush1.bf16.msra.mxu0 0
      %409 = vmatprep.subr.bf16.mxu0 0
      %410 = vmatpush1.bf16.msra.mxu0 0
      %411 = vmatprep.mubr.bf16.mxu0 0
      %412 = vmatmul.mubr.bf16.gmra.mrb[0].mxu0 %v356
      %v413 = vpop.f32.mrb[0].mxu0
      %v414 = vadd.f32 %v306, %v413
      %v415 = vpop.f32.mrb[0].mxu0
      %v416 = vpop.f32.mrb[0].mxu0
      %v417 = vadd.f32 %v306, %v416
      %v418 = vpop.f32.mrb[0].mxu0
      %419 = vmatprep.mubr.bf16.mxu0 0
      %420 = vmatmul.mubr.bf16.gmra.mrb[0].mxu0 %v359
      %v421 = vpop.f32.mrb[0].mxu0
      %v422 = vadd.f32 %v306, %v421
      %v423 = vpop.f32.mrb[0].mxu0
      %v424 = vpop.f32.mrb[0].mxu0
      %v425 = vadd.f32 %v306, %v424
      %v426 = vpop.f32.mrb[0].mxu0
      %427 = vmatprep.mubr.bf16.mxu0 0
      %428 = vmatmul.mubr.bf16.gmra.mrb[0].mxu0 %v362
      %v429 = vpop.f32.mrb[0].mxu0
      %v430 = vadd.f32 %v306, %v429
      %v431 = vpop.f32.mrb[0].mxu0
      %v432 = vpop.f32.mrb[0].mxu0
      %v433 = vadd.f32 %v306, %v432
      %v434 = vpop.f32.mrb[0].mxu0
      %435 = vmatprep.mubr.bf16.mxu0 0
      %436 = vmatmul.mubr.bf16.gmra.mrb[0].mxu0 %v365
      %v437 = vpop.f32.mrb[0].mxu0
      %v438 = vadd.f32 %v306, %v437
      %v439 = vpop.f32.mrb[0].mxu0
      %v440 = vpop.f32.mrb[0].mxu0
      %v441 = vadd.f32 %v306, %v440
      %v442 = vpop.f32.mrb[0].mxu0
      %443 = vmatprep.mubr.bf16.mxu0 0
      %444 = vmatmul.mubr.bf16.gmra.mrb[0].mxu0 %v368
      %v445 = vpop.f32.mrb[0].mxu0
      %v446 = vadd.f32 %v306, %v445
      %v447 = vpop.f32.mrb[0].mxu0
      %v448 = vpop.f32.mrb[0].mxu0
      %v449 = vadd.f32 %v306, %v448
      %v450 = vpop.f32.mrb[0].mxu0
      %451 = vmatprep.mubr.bf16.mxu0 0
      %452 = vmatmul.mubr.bf16.gmra.mrb[0].mxu0 %v371
      %v453 = vpop.f32.mrb[0].mxu0
      %v454 = vadd.f32 %v306, %v453
      %v455 = vpop.f32.mrb[0].mxu0
      %v456 = vpop.f32.mrb[0].mxu0
      %v457 = vadd.f32 %v306, %v456
      %v458 = vpop.f32.mrb[0].mxu0
      %459 = vmatprep.mubr.bf16.mxu0 0
      %460 = vmatmul.mubr.bf16.gmra.mrb[0].mxu0 %v374
      %v461 = vpop.f32.mrb[0].mxu0
      %v462 = vadd.f32 %v306, %v461
      %v463 = vpop.f32.mrb[0].mxu0
      %v464 = vpop.f32.mrb[0].mxu0
      %v465 = vadd.f32 %v306, %v464
      %v466 = vpop.f32.mrb[0].mxu0
      %467 = vmatprep.mubr.bf16.mxu0 0
      %468 = vmatmul.mubr.bf16.gmra.mrb[0].mxu0 %v377
      %v469 = vpop.f32.mrb[0].mxu0
      %v470 = vadd.f32 %v306, %v469
      %v471 = vpop.f32.mrb[0].mxu0
      %v472 = vpop.f32.mrb[0].mxu0
      %v473 = vadd.f32 %v306, %v472
      %v474 = vpop.f32.mrb[0].mxu0
      %475 = vdwg.mxu0
      %v476 = vmax.f32 %v414, 0.0
      %v477 = vmax.f32 %v417, 0.0
      %v478 = vmax.f32 %v422, 0.0
      %v479 = vmax.f32 %v425, 0.0
      %v480 = vmax.f32 %v430, 0.0
      %v481 = vmax.f32 %v433, 0.0
      %v482 = vmax.f32 %v438, 0.0
      %v483 = vmax.f32 %v441, 0.0
      %v484 = vmax.f32 %v446, 0.0
      %v485 = vmax.f32 %v449, 0.0
      %v486 = vmax.f32 %v454, 0.0
      %v487 = vmax.f32 %v457, 0.0
      %v488 = vmax.f32 %v462, 0.0
      %v489 = vmax.f32 %v465, 0.0
      %v490 = vmax.f32 %v470, 0.0
      %v491 = vmax.f32 %v473, 0.0
      %v492 = vpack.c.bf16 %v477, %v476
      %v493 = vpack.c.bf16 %v479, %v478
      %v494 = vpack.c.bf16 %v481, %v480
      %v495 = vpack.c.bf16 %v483, %v482
      %v496 = vpack.c.bf16 %v485, %v484
      %v497 = vpack.c.bf16 %v487, %v486
      %v498 = vpack.c.bf16 %v489, %v488
      %v499 = vpack.c.bf16 %v491, %v490
      %v500 = vld [vmem:[%s3] sm:$0xf]
      %v501 = vld [vmem:[%s3 + $0x4] sm:$0xf]
      %v502 = vld [vmem:[%s3 + $0x8] sm:$0xf]
      %v503 = vld [vmem:[%s3 + $0xc] sm:$0xf]
      %v504 = vld [vmem:[%s4] sm:$0x1]
      %v506 = vlaneseq
      %v507 = vshrl.u32 %v506, 7
      %v508 = vsub.s32 0, %v507
      %v509 = vrot.slane %v504, %v508
      %v515 = vunpack.c.l.b16 %v500
      %v516 = vunpack.c.l.b16 %v501
      %v517 = vunpack.c.l.b16 %v502
      %v518 = vunpack.c.l.b16 %v503
      %v519 = vpack.c.b16 %v516, %v515
      %v520 = vpack.c.b16 %v518, %v517
      %vm523 = vcmask 261120
      %v525 = vsel %vm523, %v492, 0
      %v528 = vsel %vm523, %v493, 0
      %v531 = vsel %vm523, %v494, 0
      %v534 = vsel %vm523, %v495, 0
      %v537 = vsel %vm523, %v496, 0
      %v540 = vsel %vm523, %v497, 0
      %v543 = vsel %vm523, %v498, 0
      %v546 = vsel %vm523, %v499, 0
      %548 = vmatprep.subr.bf16.mxu0 0
      %549 = vmatpush1.bf16.msra.mxu0 %v519
      %550 = vmatprep.subr.bf16.mxu0 0
      %551 = vmatpush1.bf16.msra.mxu0 %v520
      %552 = vmatprep.subr.bf16.mxu0 0
      %553 = vmatpush1.bf16.msra.mxu0 0
      %554 = vmatprep.subr.bf16.mxu0 0
      %555 = vmatpush1.bf16.msra.mxu0 0
      %556 = vmatprep.subr.bf16.mxu0 0
      %557 = vmatpush1.bf16.msra.mxu0 0
      %558 = vmatprep.subr.bf16.mxu0 0
      %559 = vmatpush1.bf16.msra.mxu0 0
      %560 = vmatprep.subr.bf16.mxu0 0
      %561 = vmatpush1.bf16.msra.mxu0 0
      %562 = vmatprep.subr.bf16.mxu0 0
      %563 = vmatpush1.bf16.msra.mxu0 0
      %564 = vmatprep.subr.bf16.mxu0 0
      %565 = vmatpush1.bf16.msra.mxu0 0
      %566 = vmatprep.subr.bf16.mxu0 0
      %567 = vmatpush1.bf16.msra.mxu0 0
      %568 = vmatprep.subr.bf16.mxu0 0
      %569 = vmatpush1.bf16.msra.mxu0 0
      %570 = vmatprep.subr.bf16.mxu0 0
      %571 = vmatpush1.bf16.msra.mxu0 0
      %572 = vmatprep.subr.bf16.mxu0 0
      %573 = vmatpush1.bf16.msra.mxu0 0
      %574 = vmatprep.subr.bf16.mxu0 0
      %575 = vmatpush1.bf16.msra.mxu0 0
      %576 = vmatprep.subr.bf16.mxu0 0
      %577 = vmatpush1.bf16.msra.mxu0 0
      %578 = vmatprep.subr.bf16.mxu0 0
      %579 = vmatpush1.bf16.msra.mxu0 0
      %580 = vmatprep.mubr.bf16.mxu0 0
      %581 = vmatmul.mubr.bf16.gmra.mrb[0].mxu0 %v525
      %v582 = vpop.f32.mrb[0].mxu0
      %v583 = vadd.f32 %v509, %v582
      %v584 = vpop.f32.mrb[0].mxu0
      %v585 = vpop.f32.mrb[0].mxu0
      %v586 = vadd.f32 %v509, %v585
      %v587 = vpop.f32.mrb[0].mxu0
      %588 = vmatprep.mubr.bf16.mxu0 0
      %589 = vmatmul.mubr.bf16.gmra.mrb[0].mxu0 %v528
      %v590 = vpop.f32.mrb[0].mxu0
      %v591 = vadd.f32 %v509, %v590
      %v592 = vpop.f32.mrb[0].mxu0
      %v593 = vpop.f32.mrb[0].mxu0
      %v594 = vadd.f32 %v509, %v593
      %v595 = vpop.f32.mrb[0].mxu0
      %596 = vmatprep.mubr.bf16.mxu0 0
      %597 = vmatmul.mubr.bf16.gmra.mrb[0].mxu0 %v531
      %v598 = vpop.f32.mrb[0].mxu0
      %v599 = vadd.f32 %v509, %v598
      %v600 = vpop.f32.mrb[0].mxu0
      %v601 = vpop.f32.mrb[0].mxu0
      %v602 = vadd.f32 %v509, %v601
      %v603 = vpop.f32.mrb[0].mxu0
      %604 = vmatprep.mubr.bf16.mxu0 0
      %605 = vmatmul.mubr.bf16.gmra.mrb[0].mxu0 %v534
      %v606 = vpop.f32.mrb[0].mxu0
      %v607 = vadd.f32 %v509, %v606
      %v608 = vpop.f32.mrb[0].mxu0
      %v609 = vpop.f32.mrb[0].mxu0
      %v610 = vadd.f32 %v509, %v609
      %v611 = vpop.f32.mrb[0].mxu0
      %612 = vmatprep.mubr.bf16.mxu0 0
      %613 = vmatmul.mubr.bf16.gmra.mrb[0].mxu0 %v537
      %v614 = vpop.f32.mrb[0].mxu0
      %v615 = vadd.f32 %v509, %v614
      %v616 = vpop.f32.mrb[0].mxu0
      %v617 = vpop.f32.mrb[0].mxu0
      %v618 = vadd.f32 %v509, %v617
      %v619 = vpop.f32.mrb[0].mxu0
      %620 = vmatprep.mubr.bf16.mxu0 0
      %621 = vmatmul.mubr.bf16.gmra.mrb[0].mxu0 %v540
      %v622 = vpop.f32.mrb[0].mxu0
      %v623 = vadd.f32 %v509, %v622
      %v624 = vpop.f32.mrb[0].mxu0
      %v625 = vpop.f32.mrb[0].mxu0
      %v626 = vadd.f32 %v509, %v625
      %v627 = vpop.f32.mrb[0].mxu0
      %628 = vmatprep.mubr.bf16.mxu0 0
      %629 = vmatmul.mubr.bf16.gmra.mrb[0].mxu0 %v543
      %v630 = vpop.f32.mrb[0].mxu0
      %v631 = vadd.f32 %v509, %v630
      %v632 = vpop.f32.mrb[0].mxu0
      %v633 = vpop.f32.mrb[0].mxu0
      %v634 = vadd.f32 %v509, %v633
      %v635 = vpop.f32.mrb[0].mxu0
      %636 = vmatprep.mubr.bf16.mxu0 0
      %637 = vmatmul.mubr.bf16.gmra.mrb[0].mxu0 %v546
      %v638 = vpop.f32.mrb[0].mxu0
      %v639 = vadd.f32 %v509, %v638
      %v640 = vpop.f32.mrb[0].mxu0
      %v641 = vpop.f32.mrb[0].mxu0
      %v642 = vadd.f32 %v509, %v641
      %v643 = vpop.f32.mrb[0].mxu0
      %644 = vdwg.mxu0
      %v645 = vmax.f32 %v583, 0.0
      %v646 = vmax.f32 %v586, 0.0
      %v647 = vmax.f32 %v591, 0.0
      %v648 = vmax.f32 %v594, 0.0
      %v649 = vmax.f32 %v599, 0.0
      %v650 = vmax.f32 %v602, 0.0
      %v651 = vmax.f32 %v607, 0.0
      %v652 = vmax.f32 %v610, 0.0
      %v653 = vmax.f32 %v615, 0.0
      %v654 = vmax.f32 %v618, 0.0
      %v655 = vmax.f32 %v623, 0.0
      %v656 = vmax.f32 %v626, 0.0
      %v657 = vmax.f32 %v631, 0.0
      %v658 = vmax.f32 %v634, 0.0
      %v659 = vmax.f32 %v639, 0.0
      %v660 = vmax.f32 %v642, 0.0
      %v661 = vpack.c.bf16 %v646, %v645
      %v662 = vpack.c.bf16 %v648, %v647
      %v663 = vpack.c.bf16 %v650, %v649
      %v664 = vpack.c.bf16 %v652, %v651
      %v665 = vpack.c.bf16 %v654, %v653
      %v666 = vpack.c.bf16 %v656, %v655
      %v667 = vpack.c.bf16 %v658, %v657
      %v668 = vpack.c.bf16 %v660, %v659
      %v669 = vld [vmem:[%s5] sm:$0xf]
      %v670 = vld [vmem:[%s5 + $0x4] sm:$0xf]
      %v671 = vld [vmem:[%s5 + $0x8] sm:$0xf]
      %v672 = vld [vmem:[%s5 + $0xc] sm:$0xf]
      %v673 = vld [vmem:[%s6] sm:$0x1]
      %v675 = vlaneseq
      %v676 = vshrl.u32 %v675, 7
      %v677 = vsub.s32 0, %v676
      %v678 = vrot.slane %v673, %v677
      %v684 = vunpack.c.l.b16 %v669
      %v685 = vunpack.c.l.b16 %v670
      %v686 = vunpack.c.l.b16 %v671
      %v687 = vunpack.c.l.b16 %v672
      %v688 = vpack.c.b16 %v685, %v684
      %v689 = vpack.c.b16 %v687, %v686
      %v693 = vsel %vm523, %v661, 0
      %v696 = vsel %vm523, %v662, 0
      %v699 = vsel %vm523, %v663, 0
      %v702 = vsel %vm523, %v664, 0
      %v705 = vsel %vm523, %v665, 0
      %v708 = vsel %vm523, %v666, 0
      %v711 = vsel %vm523, %v667, 0
      %v714 = vsel %vm523, %v668, 0
      %716 = vmatprep.subr.bf16.mxu0 0
      %717 = vmatpush1.bf16.msra.mxu0 %v688
      %718 = vmatprep.subr.bf16.mxu0 0
      %719 = vmatpush1.bf16.msra.mxu0 %v689
      %720 = vmatprep.subr.bf16.mxu0 0
      %721 = vmatpush1.bf16.msra.mxu0 0
      %722 = vmatprep.subr.bf16.mxu0 0
      %723 = vmatpush1.bf16.msra.mxu0 0
      %724 = vmatprep.subr.bf16.mxu0 0
      %725 = vmatpush1.bf16.msra.mxu0 0
      %726 = vmatprep.subr.bf16.mxu0 0
      %727 = vmatpush1.bf16.msra.mxu0 0
      %728 = vmatprep.subr.bf16.mxu0 0
      %729 = vmatpush1.bf16.msra.mxu0 0
      %730 = vmatprep.subr.bf16.mxu0 0
      %731 = vmatpush1.bf16.msra.mxu0 0
      %732 = vmatprep.subr.bf16.mxu0 0
      %733 = vmatpush1.bf16.msra.mxu0 0
      %734 = vmatprep.subr.bf16.mxu0 0
      %735 = vmatpush1.bf16.msra.mxu0 0
      %736 = vmatprep.subr.bf16.mxu0 0
      %737 = vmatpush1.bf16.msra.mxu0 0
      %738 = vmatprep.subr.bf16.mxu0 0
      %739 = vmatpush1.bf16.msra.mxu0 0
      %740 = vmatprep.subr.bf16.mxu0 0
      %741 = vmatpush1.bf16.msra.mxu0 0
      %742 = vmatprep.subr.bf16.mxu0 0
      %743 = vmatpush1.bf16.msra.mxu0 0
      %744 = vmatprep.subr.bf16.mxu0 0
      %745 = vmatpush1.bf16.msra.mxu0 0
      %746 = vmatprep.subr.bf16.mxu0 0
      %747 = vmatpush1.bf16.msra.mxu0 0
      %748 = vmatprep.mubr.bf16.mxu0 0
      %749 = vmatmul.mubr.bf16.gmra.mrb[0].mxu0 %v693
      %v750 = vpop.f32.mrb[0].mxu0
      %v751 = vadd.f32 %v678, %v750
      %v752 = vpop.f32.mrb[0].mxu0
      %v753 = vpop.f32.mrb[0].mxu0
      %v754 = vadd.f32 %v678, %v753
      %v755 = vpop.f32.mrb[0].mxu0
      %756 = vmatprep.mubr.bf16.mxu0 0
      %757 = vmatmul.mubr.bf16.gmra.mrb[0].mxu0 %v696
      %v758 = vpop.f32.mrb[0].mxu0
      %v759 = vadd.f32 %v678, %v758
      %v760 = vpop.f32.mrb[0].mxu0
      %v761 = vpop.f32.mrb[0].mxu0
      %v762 = vadd.f32 %v678, %v761
      %v763 = vpop.f32.mrb[0].mxu0
      %764 = vmatprep.mubr.bf16.mxu0 0
      %765 = vmatmul.mubr.bf16.gmra.mrb[0].mxu0 %v699
      %v766 = vpop.f32.mrb[0].mxu0
      %v767 = vadd.f32 %v678, %v766
      %v768 = vpop.f32.mrb[0].mxu0
      %v769 = vpop.f32.mrb[0].mxu0
      %v770 = vadd.f32 %v678, %v769
      %v771 = vpop.f32.mrb[0].mxu0
      %772 = vmatprep.mubr.bf16.mxu0 0
      %773 = vmatmul.mubr.bf16.gmra.mrb[0].mxu0 %v702
      %v774 = vpop.f32.mrb[0].mxu0
      %v775 = vadd.f32 %v678, %v774
      %v776 = vpop.f32.mrb[0].mxu0
      %v777 = vpop.f32.mrb[0].mxu0
      %v778 = vadd.f32 %v678, %v777
      %v779 = vpop.f32.mrb[0].mxu0
      %780 = vmatprep.mubr.bf16.mxu0 0
      %781 = vmatmul.mubr.bf16.gmra.mrb[0].mxu0 %v705
      %v782 = vpop.f32.mrb[0].mxu0
      %v783 = vadd.f32 %v678, %v782
      %v784 = vpop.f32.mrb[0].mxu0
      %v785 = vpop.f32.mrb[0].mxu0
      %v786 = vadd.f32 %v678, %v785
      %v787 = vpop.f32.mrb[0].mxu0
      %788 = vmatprep.mubr.bf16.mxu0 0
      %789 = vmatmul.mubr.bf16.gmra.mrb[0].mxu0 %v708
      %v790 = vpop.f32.mrb[0].mxu0
      %v791 = vadd.f32 %v678, %v790
      %v792 = vpop.f32.mrb[0].mxu0
      %v793 = vpop.f32.mrb[0].mxu0
      %v794 = vadd.f32 %v678, %v793
      %v795 = vpop.f32.mrb[0].mxu0
      %796 = vmatprep.mubr.bf16.mxu0 0
      %797 = vmatmul.mubr.bf16.gmra.mrb[0].mxu0 %v711
      %v798 = vpop.f32.mrb[0].mxu0
      %v799 = vadd.f32 %v678, %v798
      %v800 = vpop.f32.mrb[0].mxu0
      %v801 = vpop.f32.mrb[0].mxu0
      %v802 = vadd.f32 %v678, %v801
      %v803 = vpop.f32.mrb[0].mxu0
      %804 = vmatprep.mubr.bf16.mxu0 0
      %805 = vmatmul.mubr.bf16.gmra.mrb[0].mxu0 %v714
      %v806 = vpop.f32.mrb[0].mxu0
      %v807 = vadd.f32 %v678, %v806
      %v808 = vpop.f32.mrb[0].mxu0
      %v809 = vpop.f32.mrb[0].mxu0
      %v810 = vadd.f32 %v678, %v809
      %v811 = vpop.f32.mrb[0].mxu0
      %812 = vdwg.mxu0
      %v813 = vtanh.pop %v751
      %v814 = vtanh.pop %v754
      %v815 = vtanh.pop %v759
      %v816 = vtanh.pop %v762
      %v817 = vtanh.pop %v767
      %v818 = vtanh.pop %v770
      %v819 = vtanh.pop %v775
      %v820 = vtanh.pop %v778
      %v821 = vtanh.pop %v783
      %v822 = vtanh.pop %v786
      %v823 = vtanh.pop %v791
      %v824 = vtanh.pop %v794
      %v825 = vtanh.pop %v799
      %v826 = vtanh.pop %v802
      %v827 = vtanh.pop %v807
      %v828 = vtanh.pop %v810
      %vm829 = vcmask 64512
      %830 = vst.msk [vmem:[%s280] sm:$0xff] %vm829, %v813
      %831 = vst.msk [vmem:[%s280 + $0x8] sm:$0xff] %vm829, %v814
      %832 = vst.msk [vmem:[%s280 + $0x10] sm:$0xff] %vm829, %v815
      %833 = vst.msk [vmem:[%s280 + $0x18] sm:$0xff] %vm829, %v816
      %834 = vst.msk [vmem:[%s280 + $0x20] sm:$0xff] %vm829, %v817
      %835 = vst.msk [vmem:[%s280 + $0x28] sm:$0xff] %vm829, %v818
      %836 = vst.msk [vmem:[%s280 + $0x30] sm:$0xff] %vm829, %v819
      %837 = vst.msk [vmem:[%s280 + $0x38] sm:$0xff] %vm829, %v820
      %838 = vst.msk [vmem:[%s280 + $0x40] sm:$0xff] %vm829, %v821
      %839 = vst.msk [vmem:[%s280 + $0x48] sm:$0xff] %vm829, %v822
      %840 = vst.msk [vmem:[%s280 + $0x50] sm:$0xff] %vm829, %v823
      %841 = vst.msk [vmem:[%s280 + $0x58] sm:$0xff] %vm829, %v824
      %842 = vst.msk [vmem:[%s280 + $0x60] sm:$0xff] %vm829, %v825
      %843 = vst.msk [vmem:[%s280 + $0x68] sm:$0xff] %vm829, %v826
      %844 = vst.msk [vmem:[%s280 + $0x70] sm:$0xff] %vm829, %v827
      %845 = vst.msk [vmem:[%s280 + $0x78] sm:$0xff] %vm829, %v828
      %s846 = smul.u32 16, %s18
      %p847 = scmp.lt.s32.totalorder %s846, 31
      %s848 = scalar_select %p847, %s846, 31
      %s849 = smul.addr %s848, 8
      %s850 = scalar_lea.vmem %s7, %s849
      // Predicated region
      $region49: #{actor_forward.1} parent=47 // pred_check
        %p851 = pneg %p188
      $region50: #{actor_forward.1} parent=47 // pred_check_branch
        %853 = sbr.rel (%p851) target = $region52
      $region51: #{actor_forward.1} parent=47 // pred_region
        %s854 = smul.u32 16, %s18
      $region52: #{actor_forward.1} parent=47 // pred_fallthru
        _
    $region48: #{actor_forward.1} parent=5 // pred_fallthru
      _
    %p855 = scmp.le.s32.totalorder 2, %s13
    // Predicated region
    $region53: #{actor_forward.1} parent=5 // pred_check
      %p856 = pneg %p855
    $region54: #{actor_forward.1} parent=5 // pred_check_branch
      %858 = sbr.rel (%p856) target = $region56
    $region55: #{actor_forward.1} parent=5 // pred_region
      %s859 = ssub.s32 %s13, 2
      // Predicated region
      $region57: #{actor_forward.1} parent=55 // pred_check
        %p860 = pneg %p194
      $region58: #{actor_forward.1} parent=55 // pred_check_branch
        %862 = sbr.rel (%p860) target = $region60
      $region59: #{actor_forward.1} parent=55 // pred_region
        %s863 = smul.u32 16, %s19
        %p864 = scmp.lt.s32.totalorder %s863, 31
        %s865 = scalar_select %p864, %s863, 31
        %s866 = smul.addr %s865, 8
        %s867 = scalar_lea.vmem %s7, %s866
      $region60: #{actor_forward.1} parent=55 // pred_fallthru
        _
    $region56: #{actor_forward.1} parent=5 // pred_fallthru
      _
  $region6: #{actor_forward.1} parent=0 // loop_footer
    %s17 = sadd.s32 1, %s13
  $region7: #{actor_forward.1} parent=0 // loop_footer_branch
    %12 = sbr.rel target = $region3
  $region8: #{actor_forward.1} parent=0 // loop_exit
    _

</llo_original>
